<compile_context>
chip_gen: v6e
topology: v6e:2x2x1
jax: 0.10.0
libtpu: 0.0.40
codegen_flags: <defaults>
</compile_context>

<pallas_src>
import jax
import jax.numpy as jnp
from jax import lax
from jax.experimental import pallas as pl
from jax.experimental.pallas import tpu as pltpu


def _round_up(v, m):
    return ((v + m - 1) // m) * m


def _patch_embed_kernel(x_ref, w_ref, b_ref, o_ref):
    # x_ref: (TM, K)   patch vectors (one M tile)
    # w_ref: (N, K)    projection weight, (embed, K) orientation (VMEM resident)
    # b_ref: (1, N)    bias (f32, VMEM resident)
    # o_ref: (TM, N)   output embeddings
    acc = lax.dot_general(
        x_ref[...], w_ref[...],
        dimension_numbers=(((1,), (1,)), ((), ())),   # contract K with K  -> (TM, N)
        preferred_element_type=jnp.float32)
    o_ref[...] = (acc + b_ref[...]).astype(o_ref.dtype)


def patch_embedding(x, weight, bias, patch_size, *, compute_dtype=None, tile_m=512):
    """x: [B, C, H, W] (NCHW). weight: [E, C, p, p]. bias: [E].

    Returns [B, num_patches, E], matching
    nn.Conv2d(C, E, kernel_size=p, stride=p)(x).flatten(2).transpose(1, 2).

    compute_dtype: optional dtype (e.g. jnp.bfloat16) for the GEMM operands; the
    accumulation is always f32. tile_m: rows of patches per grid step (512 is a good
    default on all gens; can be raised on v5e's 128 MiB VMEM).
    """
    B, C, H, W = x.shape
    E = weight.shape[0]
    p = patch_size
    hp, wp = H // p, W // p
    num_patches = hp * wp
    K = C * p * p
    M = B * num_patches

    cdt = jnp.dtype(compute_dtype if compute_dtype is not None else x.dtype)
    out_dtype = x.dtype

    # --- patchify (layout glue, no compute) ---
    # [B, C, hp, p, wp, p] -> [B, hp, wp, C, p, p] -> [B*num_patches, C*p*p]
    xp = x.reshape(B, C, hp, p, wp, p)
    xp = jnp.transpose(xp, (0, 2, 4, 1, 3, 5))
    xp = xp.reshape(M, K).astype(cdt)

    # Conv weight [E, C, p, p] -> (E, K)  (pure reshape, no HBM transpose)
    w = weight.reshape(E, K).astype(cdt)
    b = bias.astype(jnp.float32).reshape(1, E)

    # Lane-dense output: pad embed dim to a multiple of 128.
    N_pad = max(128, _round_up(E, 128))
    # M tile: multiple of 8 sublanes, pipelined over the grid.
    TM = min(tile_m, _round_up(M, 8))
    M_pad = _round_up(M, TM)

    if N_pad != E:
        w = jnp.pad(w, ((0, N_pad - E), (0, 0)))
        b = jnp.pad(b, ((0, 0), (0, N_pad - E)))
    if M_pad != M:
        xp = jnp.pad(xp, ((0, M_pad - M), (0, 0)))

    grid_m = M_pad // TM

    itemsize = cdt.itemsize
    cost = pl.CostEstimate(
        flops=2 * M_pad * K * N_pad,
        transcendentals=0,
        bytes_accessed=(M_pad * K + N_pad * K) * itemsize
        + M_pad * N_pad * jnp.dtype(out_dtype).itemsize
        + N_pad * 4,
    )

    out = pl.pallas_call(
        _patch_embed_kernel,
        out_shape=jax.ShapeDtypeStruct((M_pad, N_pad), out_dtype),
        grid_spec=pltpu.PrefetchScalarGridSpec(
            num_scalar_prefetch=0,
            grid=(grid_m,),
            in_specs=[
                pl.BlockSpec((TM, K), lambda i: (i, 0)),      # x: pipelined over M
                pl.BlockSpec((N_pad, K), lambda i: (0, 0)),   # weight: VMEM resident
                pl.BlockSpec((1, N_pad), lambda i: (0, 0)),   # bias:   VMEM resident
            ],
            out_specs=pl.BlockSpec((TM, N_pad), lambda i: (i, 0)),
        ),
        compiler_params=pltpu.CompilerParams(
            dimension_semantics=("parallel",)),   # megacore sharding of M tiles on v7x
        cost_estimate=cost,
    )(xp, w, b)

    # Strip padding: [M_pad, N_pad] -> [B, num_patches, E]
    return out[:M, :E].reshape(B, num_patches, E)


if __name__ == "__main__":
    # Module config (small): img_size=16, patch_size=4, in_channels=4, embed_dim=32
    img_size, patch_size, in_channels, embed_dim = 16, 4, 4, 32
    B = 2

    key = jax.random.PRNGKey(0)
    kx, kw, kb = jax.random.split(key, 3)

    x = jax.random.normal(kx, (B, in_channels, img_size, img_size), dtype=jnp.float32)
    # Deterministic parameter init (synthetic; shapes match nn.Conv2d(in, out, p, stride=p))
    weight = jax.random.normal(
        kw, (embed_dim, in_channels, patch_size, patch_size), dtype=jnp.float32) * 0.02
    bias = jax.random.normal(kb, (embed_dim,), dtype=jnp.float32) * 0.02

    # f32 path
    out = patch_embedding(x, weight, bias, patch_size)
    out = jax.block_until_ready(out)

    # Reference check against plain-JAX conv (same semantics as nn.Conv2d stride=p)
    ref = jax.lax.conv_general_dilated(
        x, weight, window_strides=(patch_size, patch_size), padding="VALID",
        dimension_numbers=("NCHW", "OIHW", "NCHW"))
    ref = ref + bias[None, :, None, None]
    ref = ref.reshape(B, embed_dim, -1).transpose(0, 2, 1)

    assert out.shape == (B, (img_size // patch_size) ** 2, embed_dim)
    assert jnp.allclose(out, ref, atol=1e-5, rtol=1e-5)

    # bf16 compute path (mem-bound win on real ViT shapes); loose tolerance due to
    # bf16 input rounding, accumulation remains f32.
    out_bf16 = patch_embedding(x, weight, bias, patch_size, compute_dtype=jnp.bfloat16)
    out_bf16 = jax.block_until_ready(out_bf16)
    assert out_bf16.shape == out.shape
    assert float(jnp.max(jnp.abs(out_bf16 - ref))) < 0.1

    print("KERNEL_OK")
</pallas_src>

<mosaic_0001>
module attributes {stable_mosaic.version = 11 : i64} {
  func.func @_patch_embed_kernel(%arg0: i32, %arg1: memref<32x64xf32, #tpu.memory_space<vmem>>, %arg2: memref<128x64xf32, #tpu.memory_space<vmem>>, %arg3: memref<1x128xf32, #tpu.memory_space<vmem>>, %arg4: memref<32x128xf32, #tpu.memory_space<vmem>>) attributes {dimension_semantics = [#tpu.dimension_semantics<parallel>], iteration_bounds = array<i64: 1>, scalar_prefetch = 0 : i64, scratch_operands = 0 : i64, tpu.core_type = #tpu.core_type<tc>, window_params = [{transform_indices = @transform_0, window_bounds = array<i64: 32, 64>}, {pipeline_mode = #tpu.pipeline_mode<synchronous>, transform_indices = @transform_1, window_bounds = array<i64: 128, 64>}, {pipeline_mode = #tpu.pipeline_mode<synchronous>, transform_indices = @transform_2, window_bounds = array<i64: 1, 128>}, {transform_indices = @transform_3, window_bounds = array<i64: 32, 128>}]} {
    %c0 = arith.constant 0 : index
    %c0_0 = arith.constant 0 : index
    %0 = vector.load %arg1[%c0, %c0_0] : memref<32x64xf32, #tpu.memory_space<vmem>>, vector<32x64xf32>
    %c0_1 = arith.constant 0 : index
    %c0_2 = arith.constant 0 : index
    %1 = vector.load %arg2[%c0_1, %c0_2] : memref<128x64xf32, #tpu.memory_space<vmem>>, vector<128x64xf32>
    %cst = arith.constant dense<0.000000e+00> : vector<32x128xf32>
    %2 = tpu.matmul %0, %1, %cst {dimension_numbers = #tpu.dot_dimension_numbers<[1], [1], [0], [0], [0, 0, 1, 0], [], []>} : vector<32x64xf32>, vector<128x64xf32>, vector<32x128xf32> -> vector<32x128xf32>
    %c0_3 = arith.constant 0 : index
    %c0_4 = arith.constant 0 : index
    %3 = vector.load %arg3[%c0_3, %c0_4] : memref<1x128xf32, #tpu.memory_space<vmem>>, vector<1x128xf32>
    %4 = vector.broadcast %3 : vector<1x128xf32> to vector<32x128xf32>
    %5 = arith.addf %2, %4 : vector<32x128xf32>
    %c0_5 = arith.constant 0 : index
    %c0_6 = arith.constant 0 : index
    %6 = vector.load %arg4[%c0_5, %c0_6] : memref<32x128xf32, #tpu.memory_space<vmem>>, vector<32x128xf32>
    tpu.vector_store %arg4[%c0_5, %c0_6], %5 {strides = array<i32>} : memref<32x128xf32, #tpu.memory_space<vmem>>, vector<32x128xf32>,
    return
  }
  func.func @transform_0(%arg0: i32) -> (i32, i32) {
    %c0_i32 = arith.constant 0 : i32
    %c0_i32_0 = arith.constant 0 : i32
    return %arg0, %c0_i32 : i32, i32
  }
  func.func @transform_1(%arg0: i32) -> (i32, i32) {
    %c0_i32 = arith.constant 0 : i32
    %c0_i32_0 = arith.constant 0 : i32
    %c0_i32_1 = arith.constant 0 : i32
    return %c0_i32, %c0_i32_0 : i32, i32
  }
  func.func @transform_2(%arg0: i32) -> (i32, i32) {
    %c0_i32 = arith.constant 0 : i32
    %c0_i32_0 = arith.constant 0 : i32
    %c0_i32_1 = arith.constant 0 : i32
    return %c0_i32, %c0_i32_0 : i32, i32
  }
  func.func @transform_3(%arg0: i32) -> (i32, i32) {
    %c0_i32 = arith.constant 0 : i32
    %c0_i32_0 = arith.constant 0 : i32
    return %arg0, %c0_i32 : i32, i32
  }
}

</mosaic_0001>

<llo_original>
// kernel: tpu_custom_call.1
$region0: #{tpu_custom_call.1}
  #allocation0 [shape = 'u32[]', space=smem, size = 0x4, offset = 0x4, fixed_abs, tag = 'smem constant byte address 0x4 - core index']
  #allocation1 [shape = 'u32[144,128]{1,0:T(1,128)}', space=vmem, size = 0x12000, scoped, tag = 'internal scratch']
  %s0 = inlined_call_operand.vmem [shape: f32[32,64], index: 0, kind: input, shape index: {}]
  %s1 = inlined_call_operand.vmem [shape: f32[128,64], index: 1, kind: input, shape index: {}]
  %s2 = inlined_call_operand.vmem [shape: f32[1,128], index: 2, kind: input, shape index: {}]
  %s3 = inlined_call_operand.hbm [shape: f32[32,128], index: 3, kind: output, shape index: {}]
  %s4 = sld [smem:[#allocation0]]
  $region22: #{tpu_custom_call.1} parent=0
    _
  %s6 = ssub.s32 1, %s4
  %s7 = scalar_select 0, %s6, %s4
  $region1: #{tpu_custom_call.1} parent=0
    #allocation2 [shape = 'u8[16384]{0}', space=vmem, size = 0x4000, scoped, tag = 'output window, operand 0, single buffered']
    #allocation3 [shape = 's32[1]{0}', space=sflag, size = 0x4, scoped, tag = 'scoped memory for tpu_custom_call.1']
    %8 = vsyncpa [#allocation3], 0
    // Predicated region
    $region2: #{tpu_custom_call.1} parent=1 // pred_check
      _
    $region3: #{tpu_custom_call.1} parent=1 // pred_check_branch
      %10 = sbr.rel (0) target = $region5
    $region4: #{tpu_custom_call.1} parent=1 // pred_region
      _
    $region5: #{tpu_custom_call.1} parent=1 // pred_fallthru
      _
    // Predicated region
    $region6: #{tpu_custom_call.1} parent=1 // pred_check
      _
    $region7: #{tpu_custom_call.1} parent=1 // pred_check_branch
      %12 = sbr.rel (0) target = $region9
    $region8: #{tpu_custom_call.1} parent=1 // pred_region
      _
    $region9: #{tpu_custom_call.1} parent=1 // pred_fallthru
      _
    // Predicated region
    $region10: #{tpu_custom_call.1} parent=1 // pred_check
      _
    $region11: #{tpu_custom_call.1} parent=1 // pred_check_branch
      %14 = sbr.rel (0) target = $region13
    $region12: #{tpu_custom_call.1} parent=1 // pred_region
      _
    $region13: #{tpu_custom_call.1} parent=1 // pred_fallthru
      _
    %v15 = vld [vmem:[%s0] sm:$0xff]
    %v16 = vld [vmem:[%s0 + $0x8] sm:$0xff]
    %v17 = vld [vmem:[%s0 + $0x10] sm:$0xff]
    %v18 = vld [vmem:[%s0 + $0x18] sm:$0xff]
    %v19 = vld [vmem:[%s1] sm:$0xff]
    %v20 = vld [vmem:[%s1 + $0x8] sm:$0xff]
    %v21 = vld [vmem:[%s1 + $0x10] sm:$0xff]
    %v22 = vld [vmem:[%s1 + $0x18] sm:$0xff]
    %v23 = vld [vmem:[%s1 + $0x20] sm:$0xff]
    %v24 = vld [vmem:[%s1 + $0x28] sm:$0xff]
    %v25 = vld [vmem:[%s1 + $0x30] sm:$0xff]
    %v26 = vld [vmem:[%s1 + $0x38] sm:$0xff]
    %v27 = vld [vmem:[%s1 + $0x40] sm:$0xff]
    %v28 = vld [vmem:[%s1 + $0x48] sm:$0xff]
    %v29 = vld [vmem:[%s1 + $0x50] sm:$0xff]
    %v30 = vld [vmem:[%s1 + $0x58] sm:$0xff]
    %v31 = vld [vmem:[%s1 + $0x60] sm:$0xff]
    %v32 = vld [vmem:[%s1 + $0x68] sm:$0xff]
    %v33 = vld [vmem:[%s1 + $0x70] sm:$0xff]
    %v34 = vld [vmem:[%s1 + $0x78] sm:$0xff]
    %v35 = vld [vmem:[%s2] sm:$0x1]
    %v37 = vlaneseq
    %v38 = vshrl.u32 %v37, 7
    %v39 = vsub.s32 0, %v38
    %v40 = vrot.slane %v35, %v39
    %vm42 = vcmask 523264
    %v44 = vsel %vm42, %v15, 0
    %v47 = vsel %vm42, %v16, 0
    %v50 = vsel %vm42, %v17, 0
    %v53 = vsel %vm42, %v18, 0
    %v56 = vsel %vm42, %v19, 0
    %v59 = vsel %vm42, %v20, 0
    %v62 = vsel %vm42, %v21, 0
    %v65 = vsel %vm42, %v22, 0
    %v68 = vsel %vm42, %v23, 0
    %v71 = vsel %vm42, %v24, 0
    %v74 = vsel %vm42, %v25, 0
    %v77 = vsel %vm42, %v26, 0
    %v80 = vsel %vm42, %v27, 0
    %v83 = vsel %vm42, %v28, 0
    %v86 = vsel %vm42, %v29, 0
    %v89 = vsel %vm42, %v30, 0
    %v92 = vsel %vm42, %v31, 0
    %v95 = vsel %vm42, %v32, 0
    %v98 = vsel %vm42, %v33, 0
    %v101 = vsel %vm42, %v34, 0
    %103 = vmatprep.subr.mxu0 0.0
    %104 = vmatpush1.xpose.msra.mxu0 %v101
    %105 = vmatprep.subr.mxu0 0.0
    %106 = vmatpush1.xpose.msra.mxu0 %v98
    %107 = vmatprep.subr.mxu0 0.0
    %108 = vmatpush1.xpose.msra.mxu0 %v95
    %109 = vmatprep.subr.mxu0 0.0
    %110 = vmatpush1.xpose.msra.mxu0 %v92
    %111 = vmatprep.subr.mxu0 0.0
    %112 = vmatpush1.xpose.msra.mxu0 %v89
    %113 = vmatprep.subr.mxu0 0.0
    %114 = vmatpush1.xpose.msra.mxu0 %v86
    %115 = vmatprep.subr.mxu0 0.0
    %116 = vmatpush1.xpose.msra.mxu0 %v83
    %117 = vmatprep.subr.mxu0 0.0
    %118 = vmatpush1.xpose.msra.mxu0 %v80
    %119 = vmatprep.subr.mxu0 0.0
    %120 = vmatpush1.xpose.msra.mxu0 %v77
    %121 = vmatprep.subr.mxu0 0.0
    %122 = vmatpush1.xpose.msra.mxu0 %v74
    %123 = vmatprep.subr.mxu0 0.0
    %124 = vmatpush1.xpose.msra.mxu0 %v71
    %125 = vmatprep.subr.mxu0 0.0
    %126 = vmatpush1.xpose.msra.mxu0 %v68
    %127 = vmatprep.subr.mxu0 0.0
    %128 = vmatpush1.xpose.msra.mxu0 %v65
    %129 = vmatprep.subr.mxu0 0.0
    %130 = vmatpush1.xpose.msra.mxu0 %v62
    %131 = vmatprep.subr.mxu0 0.0
    %132 = vmatpush1.xpose.msra.mxu0 %v59
    %133 = vmatprep.subr.mxu0 0.0
    %134 = vmatpush1.xpose.msra.mxu0 %v56
    %135 = vmatprep.subr.mxu0 0.0
    %136 = vmatpush2.xpose.msra.mxu0 0.0
    %137 = vmatprep.subr.mxu0 0.0
    %138 = vmatpush2.xpose.msra.mxu0 0.0
    %139 = vmatprep.subr.mxu0 0.0
    %140 = vmatpush2.xpose.msra.mxu0 0.0
    %141 = vmatprep.subr.mxu0 0.0
    %142 = vmatpush2.xpose.msra.mxu0 0.0
    %143 = vmatprep.subr.mxu0 0.0
    %144 = vmatpush2.xpose.msra.mxu0 0.0
    %145 = vmatprep.subr.mxu0 0.0
    %146 = vmatpush2.xpose.msra.mxu0 0.0
    %147 = vmatprep.subr.mxu0 0.0
    %148 = vmatpush2.xpose.msra.mxu0 0.0
    %149 = vmatprep.subr.mxu0 0.0
    %150 = vmatpush2.xpose.msra.mxu0 0.0
    %151 = vmatprep.subr.mxu0 0.0
    %152 = vmatpush2.xpose.msra.mxu0 0.0
    %153 = vmatprep.subr.mxu0 0.0
    %154 = vmatpush2.xpose.msra.mxu0 0.0
    %155 = vmatprep.subr.mxu0 0.0
    %156 = vmatpush2.xpose.msra.mxu0 0.0
    %157 = vmatprep.subr.mxu0 0.0
    %158 = vmatpush2.xpose.msra.mxu0 0.0
    %159 = vmatprep.subr.mxu0 0.0
    %160 = vmatpush2.xpose.msra.mxu0 0.0
    %161 = vmatprep.subr.mxu0 0.0
    %162 = vmatpush2.xpose.msra.mxu0 0.0
    %163 = vmatprep.subr.mxu0 0.0
    %164 = vmatpush2.xpose.msra.mxu0 0.0
    %165 = vmatprep.subr.mxu0 0.0
    %166 = vmatpush2.xpose.msra.mxu0 0.0
    %167 = vmatprep.mubr.f32.mxu0 0.0
    %168 = vmatmul.mubr.f32.gmra.mxu0 %v44
    %v169 = vpop.f32.mrf.mxu0
    %v170 = vadd.f32 %v40, %v169
    %v171 = vpop.f32.mrf.mxu0
    %172 = vmatprep.mubr.f32.mxu0 0.0
    %173 = vmatmul.mubr.f32.gmra.mxu0 %v47
    %v174 = vpop.f32.mrf.mxu0
    %v175 = vadd.f32 %v40, %v174
    %v176 = vpop.f32.mrf.mxu0
    %177 = vmatprep.mubr.f32.mxu0 0.0
    %178 = vmatmul.mubr.f32.gmra.mxu0 %v50
    %v179 = vpop.f32.mrf.mxu0
    %v180 = vadd.f32 %v40, %v179
    %v181 = vpop.f32.mrf.mxu0
    %182 = vmatprep.mubr.f32.mxu0 0.0
    %183 = vmatmul.mubr.f32.gmra.mxu0 %v53
    %v184 = vpop.f32.mrf.mxu0
    %v185 = vadd.f32 %v40, %v184
    %v186 = vpop.f32.mrf.mxu0
    %187 = vdwg.mxu0
    %188 = vst [vmem:[#allocation2] sm:$0xff] %v170
    %189 = vst [vmem:[#allocation2 + $0x8] sm:$0xff] %v175
    %190 = vst [vmem:[#allocation2 + $0x10] sm:$0xff] %v180
    %191 = vst [vmem:[#allocation2 + $0x18] sm:$0xff] %v185
    // Predicated region
    $region14: #{tpu_custom_call.1} parent=1 // pred_check
      _
    $region15: #{tpu_custom_call.1} parent=1 // pred_check_branch
      %193 = sbr.rel (0) target = $region17
    $region16: #{tpu_custom_call.1} parent=1 // pred_region
      %s195 = ssub.s32 512, 512
      %196 = vsyncadd [#allocation3], %s195
      %s197 = sshll.u32 [#allocation2], 4
      %s198 = int_to_ptr.vmem [resolvable:$true] %s197
      %203 = dma.vmem_to_hbm [thread:$0]  %s198, 512, %s3, [#allocation3], 128, 128, 8
    $region17: #{tpu_custom_call.1} parent=1 // pred_fallthru
      _
    // Predicated region
    $region18: #{tpu_custom_call.1} parent=1 // pred_check
      _
    $region19: #{tpu_custom_call.1} parent=1 // pred_check_branch
      %205 = sbr.rel (0) target = $region21
    $region20: #{tpu_custom_call.1} parent=1 // pred_region
      %206 = dma.done [#allocation3], 512
    $region21: #{tpu_custom_call.1} parent=1 // pred_fallthru
      _
    %207 = vsyncpa [#allocation3], 1

</llo_original>
